<compile_context>
chip_gen: v6e
topology: v6e:2x2x1
jax: 0.10.0
libtpu: 0.0.40
codegen_flags: <defaults>
</compile_context>

<pallas_src>
import jax
import jax.numpy as jnp
from jax.experimental import pallas as pl
from jax.experimental.pallas import tpu as pltpu


def _round_up(x, m):
    return (x + m - 1) // m * m


B_TILE = 8  # decode streams per batch block = MXU M rows (sublane tile)


# ----------------------------------------------------------------------------
# Kernel: one GRU decode step for one batch block; grid = (batch_blocks, T)
# ----------------------------------------------------------------------------
def _gru_decode_kernel(x_ref, h0_ref, wgx_ref, wgh_ref, bgx_ref, bhn_ref,
                       wout_ref, bout_ref, logp_ref, hfin_ref):
    t = pl.program_id(1)
    HG = hfin_ref.shape[-1]

    # First step of each batch block: load the initial hidden state into the
    # resident h_final output block, which doubles as the recurrent state.
    @pl.when(t == 0)
    def _():
        hfin_ref[...] = h0_ref[...]

    h = hfin_ref[...]                                    # (B, HG) f32
    x = jnp.maximum(x_ref[0], 0)                         # embedding row + ReLU, bf16 (B, HK)

    # Gate pre-activations: two MXU passes, f32 accumulation.  Gate columns are
    # 128-lane-aligned blocks [ r | z | n ]; r/z biases pre-summed into bgx.
    gx = jnp.dot(x, wgx_ref[...], preferred_element_type=jnp.float32) + bgx_ref[...]
    gh = jnp.dot(h.astype(jnp.bfloat16), wgh_ref[...],
                 preferred_element_type=jnp.float32)

    r = jax.nn.sigmoid(gx[:, 0 * HG:1 * HG] + gh[:, 0 * HG:1 * HG])
    z = jax.nn.sigmoid(gx[:, 1 * HG:2 * HG] + gh[:, 1 * HG:2 * HG])
    n = jnp.tanh(gx[:, 2 * HG:3 * HG] + r * (gh[:, 2 * HG:3 * HG] + bhn_ref[...]))
    hn = (1.0 - z) * n + z * h                           # (B, HG) f32
    hfin_ref[...] = hn                                   # recurrent state update

    # Output projection (bf16 MXU, f32 accumulate) + stable log-softmax over the
    # lane-dense (padded) vocab dimension; padded columns carry bias -1e30.
    logits = jnp.dot(hn.astype(jnp.bfloat16), wout_ref[...],
                     preferred_element_type=jnp.float32) + bout_ref[...]
    m = jnp.max(logits, axis=1, keepdims=True)
    lse = jnp.log(jnp.sum(jnp.exp(logits - m), axis=1, keepdims=True)) + m
    logp_ref[0] = logits - lse


# ----------------------------------------------------------------------------
# Wrapper-side weight prep (done once, amortized over all decode steps)
# ----------------------------------------------------------------------------
def prepare_decoder_params(params, weight_dtype=jnp.bfloat16):
    emb = params["embedding"].astype(jnp.float32)   # (O, H)
    w_ih = params["w_ih"].astype(jnp.float32)       # (3H, H) rows: [r | z | n]
    w_hh = params["w_hh"].astype(jnp.float32)       # (3H, H)
    b_ih = params["b_ih"].astype(jnp.float32)       # (3H,)
    b_hh = params["b_hh"].astype(jnp.float32)       # (3H,)
    w_out = params["w_out"].astype(jnp.float32)     # (O, H)
    b_out = params["b_out"].astype(jnp.float32)     # (O,)

    O, H = emb.shape
    HK = _round_up(H, 16)      # x / embedding width (K of x-gate matmul) — NOT 128
    HG = _round_up(H, 128)     # gate-block / hidden-state lane width
    Op = _round_up(O, 128)     # logit lane width

    # Embedding table (O, HK) — gathered row-wise in the wrapper, never fully
    # loaded by the kernel.
    emb_p = jnp.zeros((O, HK), jnp.float32).at[:, :H].set(emb).astype(weight_dtype)

    # Split gate weights (no in-kernel concat): wgx (HK, 3*HG), wgh (HG, 3*HG).
    wgx = jnp.zeros((HK, 3 * HG), jnp.float32)
    wgh = jnp.zeros((HG, 3 * HG), jnp.float32)
    for g in range(3):
        wgx = wgx.at[:H, g * HG:g * HG + H].set(w_ih[g * H:(g + 1) * H].T)
        wgh = wgh.at[:H, g * HG:g * HG + H].set(w_hh[g * H:(g + 1) * H].T)
    wgx = wgx.astype(weight_dtype)
    wgh = wgh.astype(weight_dtype)

    # Biases (f32, added after the f32-accumulated matmuls).  r/z input+hidden
    # biases pre-summed; the hidden n bias stays separate because PyTorch GRU
    # computes n = tanh(W_in x + b_in + r * (W_hn h + b_hn)).
    bgx = jnp.zeros((1, 3 * HG), jnp.float32)
    bgx = bgx.at[0, 0 * HG:0 * HG + H].set(b_ih[0:H] + b_hh[0:H])
    bgx = bgx.at[0, 1 * HG:1 * HG + H].set(b_ih[H:2 * H] + b_hh[H:2 * H])
    bgx = bgx.at[0, 2 * HG:2 * HG + H].set(b_ih[2 * H:3 * H])
    bhn = jnp.zeros((1, HG), jnp.float32).at[0, :H].set(b_hh[2 * H:3 * H])

    # Output projection (pre-transposed); padded logit columns get -1e30 bias.
    wout = jnp.zeros((HG, Op), jnp.float32).at[:H, :O].set(w_out.T).astype(weight_dtype)
    bout = jnp.full((1, Op), -1e30, jnp.float32).at[0, :O].set(b_out)

    return dict(emb=emb_p, wgx=wgx, wgh=wgh, bgx=bgx, bhn=bhn,
                wout=wout, bout=bout, H=H, O=O, HK=HK, HG=HG, Op=Op)


# ----------------------------------------------------------------------------
# Multi-step, multi-stream decode: the time loop lives INSIDE one pallas_call
# ----------------------------------------------------------------------------
def decoder_rnn_decode(tokens, h0, prepped):
    """Teacher-forced decode: tokens int32 (B, T), h0 f32 (B, H).

    Returns (logp (B, T, O), h_final (B, H)); step t of stream b equals
    DecoderRNN.forward(tokens[b, t], h_{b,t}) applied sequentially.
    """
    H, O = prepped["H"], prepped["O"]
    HK, HG, Op = prepped["HK"], prepped["HG"], prepped["Op"]
    B, T = tokens.shape

    Bp = _round_up(max(B, 1), B_TILE)
    nb = Bp // B_TILE

    # Gather needed embedding rows once (clamped); table never enters the kernel.
    tok = jnp.clip(tokens.astype(jnp.int32), 0, O - 1)           # (B, T)
    x_all = prepped["emb"][tok.T]                                # (T, B, HK) bf16
    x_all = jnp.zeros((T, Bp, HK), prepped["emb"].dtype).at[:, :B, :].set(x_all)

    h0_p = jnp.zeros((Bp, HG), jnp.float32).at[:B, :H].set(h0.astype(jnp.float32))

    grid_spec = pltpu.PrefetchScalarGridSpec(
        num_scalar_prefetch=0,
        grid=(nb, T),                                    # (batch blocks, decode steps)
        in_specs=[
            pl.BlockSpec((1, B_TILE, HK), lambda b, t: (t, b, 0)),   # x step block
            pl.BlockSpec((B_TILE, HG),    lambda b, t: (b, 0)),      # h0
            pl.BlockSpec((HK, 3 * HG),    lambda b, t: (0, 0)),      # wgx  (resident)
            pl.BlockSpec((HG, 3 * HG),    lambda b, t: (0, 0)),      # wgh  (resident)
            pl.BlockSpec((1, 3 * HG),     lambda b, t: (0, 0)),      # bgx  (resident)
            pl.BlockSpec((1, HG),         lambda b, t: (0, 0)),      # bhn  (resident)
            pl.BlockSpec((HG, Op),        lambda b, t: (0, 0)),      # wout (resident)
            pl.BlockSpec((1, Op),         lambda b, t: (0, 0)),      # bout (resident)
        ],
        out_specs=(
            pl.BlockSpec((1, B_TILE, Op), lambda b, t: (t, b, 0)),   # logp slab
            pl.BlockSpec((B_TILE, HG),    lambda b, t: (b, 0)),      # h_final / state
        ),
    )

    logp_p, hfin_p = pl.pallas_call(
        _gru_decode_kernel,
        out_shape=(jax.ShapeDtypeStruct((T, Bp, Op), jnp.float32),
                   jax.ShapeDtypeStruct((Bp, HG), jnp.float32)),
        grid_spec=grid_spec,
        compiler_params=pltpu.CompilerParams(
            # Batch blocks are independent (both v7x TensorCores); the step axis
            # is a sequential recurrence.
            dimension_semantics=("parallel", "arbitrary"),
            vmem_limit_bytes=32 * 1024 * 1024,
        ),
    )(x_all, h0_p, prepped["wgx"], prepped["wgh"], prepped["bgx"],
      prepped["bhn"], prepped["wout"], prepped["bout"])

    logp = jnp.transpose(logp_p[:, :B, :O], (1, 0, 2))   # (B, T, O)
    return logp, hfin_p[:B, :H]


# ----------------------------------------------------------------------------
# Single-step forward — exact DecoderRNN.forward API (token, hidden) -> (logp, hidden)
# ----------------------------------------------------------------------------
def decoder_rnn_forward(token, hidden, prepped):
    """token int32 (1,); hidden f32 (1, 1, H) -> (logp (1, O), hidden (1, 1, H))."""
    H = prepped["H"]
    logp, hfin = decoder_rnn_decode(token.reshape(1, 1), hidden.reshape(1, H), prepped)
    return logp[:, 0, :], hfin.reshape(1, 1, H)


# ----------------------------------------------------------------------------
# Pure-JAX references (f32 exact PyTorch semantics / bf16 mirror of the kernel)
# ----------------------------------------------------------------------------
def _reference_step(x_row, h, params, bf16):
    H = h.shape[-1]
    b_hh = params["b_hh"]
    if bf16:
        bf = jnp.bfloat16
        x = jnp.maximum(x_row.astype(bf), 0).reshape(1, H)
        gx = jnp.dot(x, params["w_ih"].astype(bf).T,
                     preferred_element_type=jnp.float32) + params["b_ih"]
        gh = jnp.dot(h.astype(bf), params["w_hh"].astype(bf).T,
                     preferred_element_type=jnp.float32)
    else:
        x = jnp.maximum(x_row, 0.0).reshape(1, H)
        gx = x @ params["w_ih"].T + params["b_ih"]
        gh = h @ params["w_hh"].T
    r = jax.nn.sigmoid(gx[:, :H] + gh[:, :H] + b_hh[:H])
    z = jax.nn.sigmoid(gx[:, H:2 * H] + gh[:, H:2 * H] + b_hh[H:2 * H])
    n = jnp.tanh(gx[:, 2 * H:] + r * (gh[:, 2 * H:] + b_hh[2 * H:]))
    hn = (1.0 - z) * n + z * h
    if bf16:
        logits = jnp.dot(hn.astype(jnp.bfloat16),
                         params["w_out"].astype(jnp.bfloat16).T,
                         preferred_element_type=jnp.float32) + params["b_out"]
    else:
        logits = hn @ params["w_out"].T + params["b_out"]
    return jax.nn.log_softmax(logits, axis=1), hn


def _reference_decode(tokens, h0, params, bf16):
    emb = params["embedding"]
    B, T = tokens.shape
    H = emb.shape[1]
    logps, h_fins = [], []
    for b in range(B):
        h = h0[b].reshape(1, H).astype(jnp.float32)
        row = []
        for t in range(T):
            lp, h = _reference_step(emb[tokens[b, t]], h, params, bf16)
            row.append(lp[0])
        logps.append(jnp.stack(row))
        h_fins.append(h[0])
    return jnp.stack(logps), jnp.stack(h_fins)


def make_params(key, hidden_size, output_size):
    """Deterministic init mimicking PyTorch defaults."""
    ks = jax.random.split(key, 7)
    H, O = hidden_size, output_size
    s = 1.0 / jnp.sqrt(jnp.float32(H))
    u = lambda k, shape: jax.random.uniform(k, shape, jnp.float32, -s, s)
    return {
        "embedding": jax.random.normal(ks[0], (O, H), jnp.float32),  # nn.Embedding ~ N(0,1)
        "w_ih": u(ks[1], (3 * H, H)),
        "w_hh": u(ks[2], (3 * H, H)),
        "b_ih": u(ks[3], (3 * H,)),
        "b_hh": u(ks[4], (3 * H,)),
        "w_out": u(ks[5], (O, H)),
        "b_out": u(ks[6], (O,)),
    }


if __name__ == "__main__":
    hidden_size = 32
    output_size = 64

    key = jax.random.PRNGKey(0)
    pkey, hkey, tkey, h2key = jax.random.split(key, 4)
    params = make_params(pkey, hidden_size, output_size)
    prepped = prepare_decoder_params(params)

    # ---- single decode step (exact DecoderRNN.forward semantics) ----
    token = jnp.array([7], dtype=jnp.int32)
    hidden = jax.random.normal(hkey, (1, 1, hidden_size), jnp.float32)
    logp, hnew = decoder_rnn_forward(token, hidden, prepped)
    jax.block_until_ready((logp, hnew))
    assert logp.shape == (1, output_size) and hnew.shape == (1, 1, hidden_size)

    q_lp, q_h = _reference_decode(token.reshape(1, 1), hidden.reshape(1, hidden_size),
                                  params, bf16=True)
    assert jnp.allclose(logp, q_lp[:, 0, :], atol=2e-2, rtol=2e-2)
    assert jnp.allclose(hnew.reshape(1, hidden_size), q_h, atol=1e-2, rtol=1e-2)

    f_lp, f_h = _reference_decode(token.reshape(1, 1), hidden.reshape(1, hidden_size),
                                  params, bf16=False)
    assert jnp.allclose(logp, f_lp[:, 0, :], atol=1e-1, rtol=1e-1)
    assert jnp.allclose(hnew.reshape(1, hidden_size), f_h, atol=5e-2, rtol=5e-2)

    # ---- multi-step, multi-stream decode (loop inside the kernel) ----
    B, T = 2, 6
    tokens = jax.random.randint(tkey, (B, T), 0, output_size, dtype=jnp.int32)
    h0 = jax.random.normal(h2key, (B, hidden_size), jnp.float32)
    logp_seq, h_fin = decoder_rnn_decode(tokens, h0, prepped)
    jax.block_until_ready((logp_seq, h_fin))
    assert logp_seq.shape == (B, T, output_size) and h_fin.shape == (B, hidden_size)

    q_lps, q_hf = _reference_decode(tokens, h0, params, bf16=True)
    assert jnp.allclose(logp_seq, q_lps, atol=3e-2, rtol=3e-2)
    assert jnp.allclose(h_fin, q_hf, atol=2e-2, rtol=2e-2)

    f_lps, f_hf = _reference_decode(tokens, h0, params, bf16=False)
    assert jnp.allclose(logp_seq, f_lps, atol=1e-1, rtol=1e-1)
    assert jnp.allclose(h_fin, f_hf, atol=5e-2, rtol=5e-2)

    print("KERNEL_OK")
</pallas_src>

<mosaic_0001>
module attributes {stable_mosaic.version = 11 : i64} {
  func.func @_gru_decode_kernel(%arg0: i32, %arg1: i32, %arg2: memref<1x8x32xbf16, #tpu.memory_space<vmem>>, %arg3: memref<8x128xf32, #tpu.memory_space<vmem>>, %arg4: memref<32x384xbf16, #tpu.memory_space<vmem>>, %arg5: memref<128x384xbf16, #tpu.memory_space<vmem>>, %arg6: memref<1x384xf32, #tpu.memory_space<vmem>>, %arg7: memref<1x128xf32, #tpu.memory_space<vmem>>, %arg8: memref<128x128xbf16, #tpu.memory_space<vmem>>, %arg9: memref<1x128xf32, #tpu.memory_space<vmem>>, %arg10: memref<1x8x128xf32, #tpu.memory_space<vmem>>, %arg11: memref<8x128xf32, #tpu.memory_space<vmem>>) attributes {dimension_semantics = [#tpu.dimension_semantics<parallel>, #tpu.dimension_semantics<arbitrary>], iteration_bounds = array<i64: 1, 1>, scalar_prefetch = 0 : i64, scratch_operands = 0 : i64, tpu.core_type = #tpu.core_type<tc>, window_params = [{transform_indices = @transform_0, window_bounds = array<i64: 1, 8, 32>}, {transform_indices = @transform_1, window_bounds = array<i64: 8, 128>}, {pipeline_mode = #tpu.pipeline_mode<synchronous>, transform_indices = @transform_2, window_bounds = array<i64: 32, 384>}, {pipeline_mode = #tpu.pipeline_mode<synchronous>, transform_indices = @transform_3, window_bounds = array<i64: 128, 384>}, {pipeline_mode = #tpu.pipeline_mode<synchronous>, transform_indices = @transform_4, window_bounds = array<i64: 1, 384>}, {pipeline_mode = #tpu.pipeline_mode<synchronous>, transform_indices = @transform_5, window_bounds = array<i64: 1, 128>}, {pipeline_mode = #tpu.pipeline_mode<synchronous>, transform_indices = @transform_6, window_bounds = array<i64: 128, 128>}, {pipeline_mode = #tpu.pipeline_mode<synchronous>, transform_indices = @transform_7, window_bounds = array<i64: 1, 128>}, {transform_indices = @transform_8, window_bounds = array<i64: 1, 8, 128>}, {transform_indices = @transform_9, window_bounds = array<i64: 8, 128>}]} {
    %c0_i32 = arith.constant 0 : i32
    %0 = arith.cmpi eq, %arg1, %c0_i32 : i32
    %1 = arith.extui %0 : i1 to i32
    %c0_i32_0 = arith.constant 0 : i32
    %2 = arith.cmpi ne, %1, %c0_i32_0 : i32
    scf.if %2 {
      %c0_30 = arith.constant 0 : index
      %c0_31 = arith.constant 0 : index
      %66 = vector.load %arg3[%c0_30, %c0_31] : memref<8x128xf32, #tpu.memory_space<vmem>>, vector<8x128xf32>
      %c0_32 = arith.constant 0 : index
      %c0_33 = arith.constant 0 : index
      %67 = vector.load %arg11[%c0_32, %c0_33] : memref<8x128xf32, #tpu.memory_space<vmem>>, vector<8x128xf32>
      tpu.vector_store %arg11[%c0_32, %c0_33], %66 {strides = array<i32>} : memref<8x128xf32, #tpu.memory_space<vmem>>, vector<8x128xf32>,
    } else {
    }
    %c0 = arith.constant 0 : index
    %c0_1 = arith.constant 0 : index
    %3 = vector.load %arg11[%c0, %c0_1] : memref<8x128xf32, #tpu.memory_space<vmem>>, vector<8x128xf32>
    %c0_2 = arith.constant 0 : index
    %c0_3 = arith.constant 0 : index
    %c0_4 = arith.constant 0 : index
    %4 = vector.load %arg2[%c0_2, %c0_3, %c0_4] : memref<1x8x32xbf16, #tpu.memory_space<vmem>>, vector<1x8x32xbf16>
    %5 = vector.shape_cast %4 : vector<1x8x32xbf16> to vector<8x32xbf16>
    %cst = arith.constant 0.000000e+00 : bf16
    %6 = vector.broadcast %cst : bf16 to vector<8x32xbf16>
    %7 = arith.maximumf %5, %6 : vector<8x32xbf16>
    %c0_5 = arith.constant 0 : index
    %c0_6 = arith.constant 0 : index
    %8 = vector.load %arg4[%c0_5, %c0_6] : memref<32x384xbf16, #tpu.memory_space<vmem>>, vector<32x384xbf16>
    %cst_7 = arith.constant dense<0.000000e+00> : vector<8x384xf32>
    %9 = tpu.matmul %7, %8, %cst_7 {dimension_numbers = #tpu.dot_dimension_numbers<[1], [0], [0], [1], [0, 0, 1, 1], [], []>} : vector<8x32xbf16>, vector<32x384xbf16>, vector<8x384xf32> -> vector<8x384xf32>
    %c0_8 = arith.constant 0 : index
    %c0_9 = arith.constant 0 : index
    %10 = vector.load %arg6[%c0_8, %c0_9] : memref<1x384xf32, #tpu.memory_space<vmem>>, vector<1x384xf32>
    %11 = vector.broadcast %10 : vector<1x384xf32> to vector<8x384xf32>
    %12 = arith.addf %9, %11 : vector<8x384xf32>
    %13 = arith.truncf %3 : vector<8x128xf32> to vector<8x128xbf16>
    %c0_10 = arith.constant 0 : index
    %c0_11 = arith.constant 0 : index
    %14 = vector.load %arg5[%c0_10, %c0_11] : memref<128x384xbf16, #tpu.memory_space<vmem>>, vector<128x384xbf16>
    %cst_12 = arith.constant dense<0.000000e+00> : vector<8x384xf32>
    %15 = tpu.matmul %13, %14, %cst_12 {dimension_numbers = #tpu.dot_dimension_numbers<[1], [0], [0], [1], [0, 0, 1, 1], [], []>} : vector<8x128xbf16>, vector<128x384xbf16>, vector<8x384xf32> -> vector<8x384xf32>
    %16 = vector.extract_strided_slice %12 {offsets = [0, 0], sizes = [8, 128], strides = [1, 1]} : vector<8x384xf32> to vector<8x128xf32>
    %17 = vector.extract_strided_slice %15 {offsets = [0, 0], sizes = [8, 128], strides = [1, 1]} : vector<8x384xf32> to vector<8x128xf32>
    %18 = arith.addf %16, %17 : vector<8x128xf32>
    %19 = arith.negf %18 : vector<8x128xf32>
    %20 = math.exp %19 : vector<8x128xf32>
    %cst_13 = arith.constant 1.000000e+00 : f32
    %21 = vector.broadcast %cst_13 : f32 to vector<8x128xf32>
    %22 = arith.addf %21, %20 : vector<8x128xf32>
    %23 = arith.divf %21, %22 : vector<8x128xf32>
    %24 = vector.extract_strided_slice %12 {offsets = [0, 128], sizes = [8, 128], strides = [1, 1]} : vector<8x384xf32> to vector<8x128xf32>
    %25 = vector.extract_strided_slice %15 {offsets = [0, 128], sizes = [8, 128], strides = [1, 1]} : vector<8x384xf32> to vector<8x128xf32>
    %26 = arith.addf %24, %25 : vector<8x128xf32>
    %27 = arith.negf %26 : vector<8x128xf32>
    %28 = math.exp %27 : vector<8x128xf32>
    %cst_14 = arith.constant 1.000000e+00 : f32
    %29 = vector.broadcast %cst_14 : f32 to vector<8x128xf32>
    %30 = arith.addf %29, %28 : vector<8x128xf32>
    %31 = arith.divf %29, %30 : vector<8x128xf32>
    %32 = vector.extract_strided_slice %12 {offsets = [0, 256], sizes = [8, 128], strides = [1, 1]} : vector<8x384xf32> to vector<8x128xf32>
    %33 = vector.extract_strided_slice %15 {offsets = [0, 256], sizes = [8, 128], strides = [1, 1]} : vector<8x384xf32> to vector<8x128xf32>
    %c0_15 = arith.constant 0 : index
    %c0_16 = arith.constant 0 : index
    %34 = vector.load %arg7[%c0_15, %c0_16] : memref<1x128xf32, #tpu.memory_space<vmem>>, vector<1x128xf32>
    %35 = vector.broadcast %34 : vector<1x128xf32> to vector<8x128xf32>
    %36 = arith.addf %33, %35 : vector<8x128xf32>
    %37 = arith.mulf %23, %36 : vector<8x128xf32>
    %38 = arith.addf %32, %37 : vector<8x128xf32>
    %39 = math.tanh %38 : vector<8x128xf32>
    %cst_17 = arith.constant 1.000000e+00 : f32
    %40 = vector.broadcast %cst_17 : f32 to vector<8x128xf32>
    %41 = arith.subf %40, %31 : vector<8x128xf32>
    %42 = arith.mulf %41, %39 : vector<8x128xf32>
    %43 = arith.mulf %31, %3 : vector<8x128xf32>
    %44 = arith.addf %42, %43 : vector<8x128xf32>
    %c0_18 = arith.constant 0 : index
    %c0_19 = arith.constant 0 : index
    %45 = vector.load %arg11[%c0_18, %c0_19] : memref<8x128xf32, #tpu.memory_space<vmem>>, vector<8x128xf32>
    tpu.vector_store %arg11[%c0_18, %c0_19], %44 {strides = array<i32>} : memref<8x128xf32, #tpu.memory_space<vmem>>, vector<8x128xf32>,
    %46 = arith.truncf %44 : vector<8x128xf32> to vector<8x128xbf16>
    %c0_20 = arith.constant 0 : index
    %c0_21 = arith.constant 0 : index
    %47 = vector.load %arg8[%c0_20, %c0_21] : memref<128x128xbf16, #tpu.memory_space<vmem>>, vector<128x128xbf16>
    %cst_22 = arith.constant dense<0.000000e+00> : vector<8x128xf32>
    %48 = tpu.matmul %46, %47, %cst_22 {dimension_numbers = #tpu.dot_dimension_numbers<[1], [0], [0], [1], [0, 0, 1, 1], [], []>} : vector<8x128xbf16>, vector<128x128xbf16>, vector<8x128xf32> -> vector<8x128xf32>
    %c0_23 = arith.constant 0 : index
    %c0_24 = arith.constant 0 : index
    %49 = vector.load %arg9[%c0_23, %c0_24] : memref<1x128xf32, #tpu.memory_space<vmem>>, vector<1x128xf32>
    %50 = vector.broadcast %49 : vector<1x128xf32> to vector<8x128xf32>
    %51 = arith.addf %48, %50 : vector<8x128xf32>
    %cst_25 = arith.constant dense<0xFF800000> : vector<8xf32>
    %52 = vector.multi_reduction <maximumf>, %51, %cst_25 [1] : vector<8x128xf32> to vector<8xf32>
    %53 = vector.shape_cast %52 : vector<8xf32> to vector<8x1xf32>
    %54 = vector.broadcast %53 : vector<8x1xf32> to vector<8x128xf32>
    %55 = arith.subf %51, %54 : vector<8x128xf32>
    %56 = math.exp %55 : vector<8x128xf32>
    %cst_26 = arith.constant dense<0.000000e+00> : vector<8xf32>
    %57 = vector.multi_reduction <add>, %56, %cst_26 [1] : vector<8x128xf32> to vector<8xf32>
    %58 = vector.shape_cast %57 : vector<8xf32> to vector<8x1xf32>
    %59 = math.log %58 : vector<8x1xf32>
    %60 = arith.addf %59, %53 : vector<8x1xf32>
    %61 = vector.broadcast %60 : vector<8x1xf32> to vector<8x128xf32>
    %62 = arith.subf %51, %61 : vector<8x128xf32>
    %c0_27 = arith.constant 0 : index
    %c0_28 = arith.constant 0 : index
    %c0_29 = arith.constant 0 : index
    %63 = vector.load %arg10[%c0_27, %c0_28, %c0_29] : memref<1x8x128xf32, #tpu.memory_space<vmem>>, vector<1x8x128xf32>
    %64 = vector.shape_cast %63 : vector<1x8x128xf32> to vector<8x128xf32>
    %65 = vector.shape_cast %62 : vector<8x128xf32> to vector<1x8x128xf32>
    tpu.vector_store %arg10[%c0_27, %c0_28, %c0_29], %65 {strides = array<i32>} : memref<1x8x128xf32, #tpu.memory_space<vmem>>, vector<1x8x128xf32>,
    return
  }
  func.func @transform_0(%arg0: i32, %arg1: i32) -> (i32, i32, i32) {
    %c0_i32 = arith.constant 0 : i32
    %c0_i32_0 = arith.constant 0 : i32
    return %arg1, %arg0, %c0_i32 : i32, i32, i32
  }
  func.func @transform_1(%arg0: i32, %arg1: i32) -> (i32, i32) {
    %c0_i32 = arith.constant 0 : i32
    %c0_i32_0 = arith.constant 0 : i32
    return %arg0, %c0_i32 : i32, i32
  }
  func.func @transform_2(%arg0: i32, %arg1: i32) -> (i32, i32) {
    %c0_i32 = arith.constant 0 : i32
    %c0_i32_0 = arith.constant 0 : i32
    %c0_i32_1 = arith.constant 0 : i32
    return %c0_i32, %c0_i32_0 : i32, i32
  }
  func.func @transform_3(%arg0: i32, %arg1: i32) -> (i32, i32) {
    %c0_i32 = arith.constant 0 : i32
    %c0_i32_0 = arith.constant 0 : i32
    %c0_i32_1 = arith.constant 0 : i32
    return %c0_i32, %c0_i32_0 : i32, i32
  }
  func.func @transform_4(%arg0: i32, %arg1: i32) -> (i32, i32) {
    %c0_i32 = arith.constant 0 : i32
    %c0_i32_0 = arith.constant 0 : i32
    %c0_i32_1 = arith.constant 0 : i32
    return %c0_i32, %c0_i32_0 : i32, i32
  }
  func.func @transform_5(%arg0: i32, %arg1: i32) -> (i32, i32) {
    %c0_i32 = arith.constant 0 : i32
    %c0_i32_0 = arith.constant 0 : i32
    %c0_i32_1 = arith.constant 0 : i32
    return %c0_i32, %c0_i32_0 : i32, i32
  }
  func.func @transform_6(%arg0: i32, %arg1: i32) -> (i32, i32) {
    %c0_i32 = arith.constant 0 : i32
    %c0_i32_0 = arith.constant 0 : i32
    %c0_i32_1 = arith.constant 0 : i32
    return %c0_i32, %c0_i32_0 : i32, i32
  }
  func.func @transform_7(%arg0: i32, %arg1: i32) -> (i32, i32) {
    %c0_i32 = arith.constant 0 : i32
    %c0_i32_0 = arith.constant 0 : i32
    %c0_i32_1 = arith.constant 0 : i32
    return %c0_i32, %c0_i32_0 : i32, i32
  }
  func.func @transform_8(%arg0: i32, %arg1: i32) -> (i32, i32, i32) {
    %c0_i32 = arith.constant 0 : i32
    %c0_i32_0 = arith.constant 0 : i32
    return %arg1, %arg0, %c0_i32 : i32, i32, i32
  }
  func.func @transform_9(%arg0: i32, %arg1: i32) -> (i32, i32) {
    %c0_i32 = arith.constant 0 : i32
    %c0_i32_0 = arith.constant 0 : i32
    return %arg0, %c0_i32 : i32, i32
  }
}

</mosaic_0001>

<llo_original>
// kernel: tpu_custom_call.1
$region0: #{tpu_custom_call.1}
  #allocation0 [shape = 'u32[]', space=smem, size = 0x4, offset = 0x4, fixed_abs, tag = 'smem constant byte address 0x4 - core index']
  #allocation1 [shape = 'u32[144,128]{1,0:T(1,128)}', space=vmem, size = 0x12000, scoped, tag = 'internal scratch']
  %s0 = inlined_call_operand.hbm [shape: bf16[1,8,32], index: 0, kind: input, shape index: {}]
  %s1 = inlined_call_operand.hbm [shape: f32[8,128], index: 1, kind: input, shape index: {}]
  %s2 = inlined_call_operand.hbm [shape: bf16[32,384], index: 2, kind: input, shape index: {}]
  %s3 = inlined_call_operand.hbm [shape: bf16[128,384], index: 3, kind: input, shape index: {}]
  %s4 = inlined_call_operand.vmem [shape: f32[1,384], index: 4, kind: input, shape index: {}]
  %s5 = inlined_call_operand.vmem [shape: f32[1,128], index: 5, kind: input, shape index: {}]
  %s6 = inlined_call_operand.hbm [shape: bf16[128,128], index: 6, kind: input, shape index: {}]
  %s7 = inlined_call_operand.vmem [shape: f32[1,128], index: 7, kind: input, shape index: {}]
  %s8 = inlined_call_operand.hbm [shape: f32[1,8,128], index: 8, kind: output, shape index: {0}]
  %s9 = inlined_call_operand.hbm [shape: f32[8,128], index: 9, kind: output, shape index: {1}]
  %10 = xla_tuple %s8, %s9
  %s11 = sld [smem:[#allocation0]]
  $region74: #{tpu_custom_call.1} parent=0
    _
  %s13 = ssub.s32 1, %s11
  %s14 = scalar_select 0, %s13, %s11
  $region1: #{tpu_custom_call.1} parent=0
    #allocation2 [shape = 'u8[2048]{0}', space=vmem, size = 0x800, scoped, tag = 'input window, operand 0, single buffered']
    #allocation3 [shape = 's32[1]{0}', space=sflag, size = 0x4, scoped, tag = 'scoped memory for tpu_custom_call.1']
    #allocation4 [shape = 's32[1]{0}', space=sflag, size = 0x4, scoped, tag = 'scoped memory for tpu_custom_call.1']
    #allocation5 [shape = 'u8[4096]{0}', space=vmem, size = 0x1000, scoped, tag = 'input window, operand 1, single buffered']
    #allocation6 [shape = 's32[1]{0}', space=sflag, size = 0x4, scoped, tag = 'scoped memory for tpu_custom_call.1']
    #allocation7 [shape = 'u8[24576]{0}', space=vmem, size = 0x6000, scoped, tag = 'input window, operand 2, single buffered']
    #allocation8 [shape = 'u8[98304]{0}', space=vmem, size = 0x18000, scoped, tag = 'input window, operand 3, single buffered']
    #allocation9 [shape = 's32[1]{0}', space=sflag, size = 0x4, scoped, tag = 'scoped memory for tpu_custom_call.1']
    #allocation10 [shape = 'u8[32768]{0}', space=vmem, size = 0x8000, scoped, tag = 'input window, operand 6, single buffered']
    #allocation11 [shape = 'u8[4096]{0}', space=vmem, size = 0x1000, scoped, tag = 'output window, operand 0, single buffered']
    #allocation12 [shape = 'u8[4096]{0}', space=vmem, size = 0x1000, scoped, tag = 'output window, operand 1, single buffered']
    #allocation13 [shape = 's32[1]{0}', space=sflag, size = 0x4, scoped, tag = 'scoped memory for tpu_custom_call.1']
    %15 = vsyncpa [#allocation3], 0
    %16 = vsyncpa [#allocation6], 0
    %17 = vsyncpa [#allocation9], 0
    %18 = vsyncpa [#allocation4], 0
    %19 = vsyncpa [#allocation13], 0
    // Predicated region
    $region2: #{tpu_custom_call.1} parent=1 // pred_check
      _
    $region3: #{tpu_custom_call.1} parent=1 // pred_check_branch
      %21 = sbr.rel (0) target = $region5
    $region4: #{tpu_custom_call.1} parent=1 // pred_region
      %s23 = ssub.s32 64, 64
      %24 = vsyncadd [#allocation3], %s23
      %s26 = sshll.u32 [#allocation2], 4
      %s27 = int_to_ptr.vmem [resolvable:$true] %s26
      %29 = dma.hbm_to_vmem [thread:$0]  %s0, 64, %s27, [#allocation3]
    $region5: #{tpu_custom_call.1} parent=1 // pred_fallthru
      _
    // Predicated region
    $region6: #{tpu_custom_call.1} parent=1 // pred_check
      _
    $region7: #{tpu_custom_call.1} parent=1 // pred_check_branch
      %31 = sbr.rel (0) target = $region9
    $region8: #{tpu_custom_call.1} parent=1 // pred_region
      %s33 = ssub.s32 128, 128
      %34 = vsyncadd [#allocation6], %s33
      %s36 = sshll.u32 [#allocation5], 4
      %s37 = int_to_ptr.vmem [resolvable:$true] %s36
      %39 = dma.hbm_to_vmem [thread:$0]  %s1, 128, %s37, [#allocation6]
    $region9: #{tpu_custom_call.1} parent=1 // pred_fallthru
      _
    // Predicated region
    $region10: #{tpu_custom_call.1} parent=1 // pred_check
      _
    $region11: #{tpu_custom_call.1} parent=1 // pred_check_branch
      %41 = sbr.rel (0) target = $region13
    $region12: #{tpu_custom_call.1} parent=1 // pred_region
      %s43 = ssub.s32 768, 768
      %44 = vsyncadd [#allocation6], %s43
      %s45 = sshll.u32 [#allocation7], 4
      %s46 = int_to_ptr.vmem [resolvable:$true] %s45
      %51 = dma.hbm_to_vmem [thread:$0]  %s2, 768, %s46, [#allocation6], 192, 192, 12
    $region13: #{tpu_custom_call.1} parent=1 // pred_fallthru
      _
    // Predicated region
    $region14: #{tpu_custom_call.1} parent=1 // pred_check
      _
    $region15: #{tpu_custom_call.1} parent=1 // pred_check_branch
      %53 = sbr.rel (0) target = $region17
    $region16: #{tpu_custom_call.1} parent=1 // pred_region
      %s55 = ssub.s32 3072, 3072
      %56 = vsyncadd [#allocation9], %s55
      %s57 = sshll.u32 [#allocation8], 4
      %s58 = int_to_ptr.vmem [resolvable:$true] %s57
      %63 = dma.hbm_to_vmem [thread:$0]  %s3, 3072, %s58, [#allocation9], 192, 192, 12
    $region17: #{tpu_custom_call.1} parent=1 // pred_fallthru
      _
    // Predicated region
    $region18: #{tpu_custom_call.1} parent=1 // pred_check
      _
    $region19: #{tpu_custom_call.1} parent=1 // pred_check_branch
      %65 = sbr.rel (0) target = $region21
    $region20: #{tpu_custom_call.1} parent=1 // pred_region
      _
    $region21: #{tpu_custom_call.1} parent=1 // pred_fallthru
      _
    // Predicated region
    $region22: #{tpu_custom_call.1} parent=1 // pred_check
      _
    $region23: #{tpu_custom_call.1} parent=1 // pred_check_branch
      %67 = sbr.rel (0) target = $region25
    $region24: #{tpu_custom_call.1} parent=1 // pred_region
      _
    $region25: #{tpu_custom_call.1} parent=1 // pred_fallthru
      _
    // Predicated region
    $region26: #{tpu_custom_call.1} parent=1 // pred_check
      _
    $region27: #{tpu_custom_call.1} parent=1 // pred_check_branch
      %69 = sbr.rel (0) target = $region29
    $region28: #{tpu_custom_call.1} parent=1 // pred_region
      %s71 = ssub.s32 1024, 1024
      %72 = vsyncadd [#allocation9], %s71
      %s73 = sshll.u32 [#allocation10], 4
      %s74 = int_to_ptr.vmem [resolvable:$true] %s73
      %79 = dma.hbm_to_vmem [thread:$0]  %s6, 1024, %s74, [#allocation9], 64, 64, 4
    $region29: #{tpu_custom_call.1} parent=1 // pred_fallthru
      _
    // Predicated region
    $region30: #{tpu_custom_call.1} parent=1 // pred_check
      _
    $region31: #{tpu_custom_call.1} parent=1 // pred_check_branch
      %81 = sbr.rel (0) target = $region33
    $region32: #{tpu_custom_call.1} parent=1 // pred_region
      _
    $region33: #{tpu_custom_call.1} parent=1 // pred_fallthru
      _
    // Predicated region
    $region34: #{tpu_custom_call.1} parent=1 // pred_check
      _
    $region35: #{tpu_custom_call.1} parent=1 // pred_check_branch
      %83 = sbr.rel (0) target = $region37
    $region36: #{tpu_custom_call.1} parent=1 // pred_region
      %84 = dma.done [#allocation3], 64
    $region37: #{tpu_custom_call.1} parent=1 // pred_fallthru
      _
    // Predicated region
    $region38: #{tpu_custom_call.1} parent=1 // pred_check
      _
    $region39: #{tpu_custom_call.1} parent=1 // pred_check_branch
      %86 = sbr.rel (0) target = $region41
    $region40: #{tpu_custom_call.1} parent=1 // pred_region
      %87 = dma.done [#allocation6], 128
    $region41: #{tpu_custom_call.1} parent=1 // pred_fallthru
      _
    // Predicated region
    $region42: #{tpu_custom_call.1} parent=1 // pred_check
      _
    $region43: #{tpu_custom_call.1} parent=1 // pred_check_branch
      %89 = sbr.rel (0) target = $region45
    $region44: #{tpu_custom_call.1} parent=1 // pred_region
      %90 = dma.done [#allocation6], 768
    $region45: #{tpu_custom_call.1} parent=1 // pred_fallthru
      _
    // Predicated region
    $region46: #{tpu_custom_call.1} parent=1 // pred_check
      _
    $region47: #{tpu_custom_call.1} parent=1 // pred_check_branch
      %92 = sbr.rel (0) target = $region49
    $region48: #{tpu_custom_call.1} parent=1 // pred_region
      %93 = dma.done [#allocation9], 3072
    $region49: #{tpu_custom_call.1} parent=1 // pred_fallthru
      _
    // Predicated region
    $region50: #{tpu_custom_call.1} parent=1 // pred_check
      _
    $region51: #{tpu_custom_call.1} parent=1 // pred_check_branch
      %95 = sbr.rel (0) target = $region53
    $region52: #{tpu_custom_call.1} parent=1 // pred_region
      %96 = dma.done [#allocation9], 1024
    $region53: #{tpu_custom_call.1} parent=1 // pred_fallthru
      _
    %p98 = scmp.eq.s32.totalorder 0, 0
    // Predicated region
    $region54: #{tpu_custom_call.1} parent=1 // pred_check
      %p99 = pneg %p98
    $region55: #{tpu_custom_call.1} parent=1 // pred_check_branch
      %101 = sbr.rel (%p99) target = $region57
    $region56: #{tpu_custom_call.1} parent=1 // pred_region
      %v102 = vld [vmem:[#allocation5] sm:$0xff]
      %103 = vst [vmem:[#allocation12] sm:$0xff] %v102
    $region57: #{tpu_custom_call.1} parent=1 // pred_fallthru
      _
    %v104 = vld [vmem:[#allocation12] sm:$0xff]
    %v105 = vld [vmem:[#allocation2] sm:$0xf]
    %v106 = vmax.bf16 %v105, 0
    %v107 = vld [vmem:[#allocation7] sm:$0xff]
    %v108 = vld [vmem:[#allocation7 + $0x8] sm:$0xf]
    %v109 = vld [vmem:[#allocation7 + $0xc] sm:$0xff]
    %v110 = vld [vmem:[#allocation7 + $0x14] sm:$0xf]
    %v111 = vld [vmem:[#allocation7 + $0x18] sm:$0xff]
    %v112 = vld [vmem:[#allocation7 + $0x20] sm:$0xf]
    %v113 = vld [vmem:[#allocation7 + $0x24] sm:$0xff]
    %v114 = vld [vmem:[#allocation7 + $0x2c] sm:$0xf]
    %v115 = vld [vmem:[%s4] sm:$0x7]
    %v117 = vlaneseq
    %v118 = vshrl.u32 %v117, 7
    %v119 = vsub.s32 0, %v118
    %v120 = vrot.slane %v115, %v119
    %v121 = vlaneseq
    %v122 = vshrl.u32 %v121, 7
    %v123 = vsub.s32 1, %v122
    %v124 = vrot.slane %v115, %v123
    %v125 = vlaneseq
    %v126 = vshrl.u32 %v125, 7
    %v127 = vsub.s32 2, %v126
    %v128 = vrot.slane %v115, %v127
    %v140 = vunpack.c.l.b16 %v107
    %v141 = vunpack.c.h.b16 %v107
    %v142 = vunpack.c.l.b16 %v108
    %v143 = vunpack.c.l.b16 %v109
    %v144 = vunpack.c.h.b16 %v109
    %v145 = vunpack.c.l.b16 %v110
    %v146 = vunpack.c.l.b16 %v111
    %v147 = vunpack.c.h.b16 %v111
    %v148 = vunpack.c.l.b16 %v112
    %v149 = vunpack.c.l.b16 %v113
    %v150 = vunpack.c.h.b16 %v113
    %v151 = vunpack.c.l.b16 %v114
    %v152 = vpack.c.b16 %v143, %v140
    %v153 = vpack.c.b16 %v144, %v141
    %v154 = vpack.c.b16 %v145, %v142
    %v155 = vpack.c.b16 %v149, %v146
    %v156 = vpack.c.b16 %v150, %v147
    %v157 = vpack.c.b16 %v151, %v148
    %vm164 = vcmask 261120
    %v166 = vsel %vm164, %v106, 0
    %168 = vmatprep.subr.bf16.mxu0 0
    %169 = vmatpush1.bf16.msra.mxu0 0
    %170 = vmatprep.subr.bf16.mxu0 0
    %171 = vmatpush1.bf16.msra.mxu0 0
    %172 = vmatprep.subr.bf16.mxu0 0
    %173 = vmatpush1.bf16.msra.mxu0 0
    %174 = vmatprep.subr.bf16.mxu0 0
    %175 = vmatpush1.bf16.msra.mxu0 0
    %176 = vmatprep.subr.bf16.mxu0 0
    %177 = vmatpush1.bf16.msra.mxu0 0
    %178 = vmatprep.subr.bf16.mxu0 0
    %179 = vmatpush1.bf16.msra.mxu0 0
    %180 = vmatprep.subr.bf16.mxu0 %v156
    %181 = vmatpush1.bf16.msra.mxu0 %v155
    %182 = vmatprep.subr.bf16.mxu0 %v153
    %183 = vmatpush1.bf16.msra.mxu0 %v152
    %184 = vmatprep.subr.bf16.mxu0 0
    %185 = vmatpush2.bf16.msra.mxu0 0
    %186 = vmatprep.subr.bf16.mxu0 0
    %187 = vmatpush2.bf16.msra.mxu0 0
    %188 = vmatprep.subr.bf16.mxu0 0
    %189 = vmatpush2.bf16.msra.mxu0 0
    %190 = vmatprep.subr.bf16.mxu0 0
    %191 = vmatpush2.bf16.msra.mxu0 0
    %192 = vmatprep.subr.bf16.mxu0 0
    %193 = vmatpush2.bf16.msra.mxu0 0
    %194 = vmatprep.subr.bf16.mxu0 0
    %195 = vmatpush2.bf16.msra.mxu0 0
    %196 = vmatprep.subr.bf16.mxu0 0
    %197 = vmatpush2.bf16.msra.mxu0 0
    %198 = vmatprep.subr.bf16.mxu0 0
    %199 = vmatpush2.bf16.msra.mxu0 0
    %200 = vmatprep.mubr.bf16.mxu0 0
    %201 = vmatmul.mubr.bf16.gmra.mxu0 %v166
    %v202 = vpop.f32.mrf.mxu0
    %v203 = vadd.f32 %v120, %v202
    %v204 = vpop.f32.mrf.mxu0
    %v205 = vadd.f32 %v124, %v204
    %v206 = vpop.f32.mrf.mxu0
    %v207 = vpop.f32.mrf.mxu0
    %208 = vdwg.mxu0
    %209 = vmatprep.subr.bf16.mxu0 0
    %210 = vmatpush1.bf16.msra.mxu0 0
    %211 = vmatprep.subr.bf16.mxu0 0
    %212 = vmatpush1.bf16.msra.mxu0 0
    %213 = vmatprep.subr.bf16.mxu0 0
    %214 = vmatpush1.bf16.msra.mxu0 0
    %215 = vmatprep.subr.bf16.mxu0 0
    %216 = vmatpush1.bf16.msra.mxu0 0
    %217 = vmatprep.subr.bf16.mxu0 0
    %218 = vmatpush1.bf16.msra.mxu0 0
    %219 = vmatprep.subr.bf16.mxu0 0
    %220 = vmatpush1.bf16.msra.mxu0 0
    %221 = vmatprep.subr.bf16.mxu0 0
    %222 = vmatpush1.bf16.msra.mxu0 %v157
    %223 = vmatprep.subr.bf16.mxu0 0
    %224 = vmatpush1.bf16.msra.mxu0 %v154
    %225 = vmatprep.subr.bf16.mxu0 0
    %226 = vmatpush2.bf16.msra.mxu0 0
    %227 = vmatprep.subr.bf16.mxu0 0
    %228 = vmatpush2.bf16.msra.mxu0 0
    %229 = vmatprep.subr.bf16.mxu0 0
    %230 = vmatpush2.bf16.msra.mxu0 0
    %231 = vmatprep.subr.bf16.mxu0 0
    %232 = vmatpush2.bf16.msra.mxu0 0
    %233 = vmatprep.subr.bf16.mxu0 0
    %234 = vmatpush2.bf16.msra.mxu0 0
    %235 = vmatprep.subr.bf16.mxu0 0
    %236 = vmatpush2.bf16.msra.mxu0 0
    %237 = vmatprep.subr.bf16.mxu0 0
    %238 = vmatpush2.bf16.msra.mxu0 0
    %239 = vmatprep.subr.bf16.mxu0 0
    %240 = vmatpush2.bf16.msra.mxu0 0
    %241 = vmatprep.mubr.bf16.mxu0 0
    %242 = vmatmul.mubr.bf16.gmra.mxu0 %v166
    %v243 = vpop.f32.mrf.mxu0
    %v244 = vadd.f32 %v128, %v243
    %v245 = vpop.f32.mrf.mxu0
    %v246 = vpop.f32.mrf.mxu0
    %v247 = vpop.f32.mrf.mxu0
    %248 = vdwg.mxu0
    %v249 = vpack.c.bf16 %v104, %v104
    %v250 = vld [vmem:[#allocation8] sm:$0xff]
    %v251 = vld [vmem:[#allocation8 + $0x8] sm:$0xf]
    %v252 = vld [vmem:[#allocation8 + $0xc] sm:$0xff]
    %v253 = vld [vmem:[#allocation8 + $0x14] sm:$0xf]
    %v254 = vld [vmem:[#allocation8 + $0x18] sm:$0xff]
    %v255 = vld [vmem:[#allocation8 + $0x20] sm:$0xf]
    %v256 = vld [vmem:[#allocation8 + $0x24] sm:$0xff]
    %v257 = vld [vmem:[#allocation8 + $0x2c] sm:$0xf]
    %v258 = vld [vmem:[#allocation8 + $0x30] sm:$0xff]
    %v259 = vld [vmem:[#allocation8 + $0x38] sm:$0xf]
    %v260 = vld [vmem:[#allocation8 + $0x3c] sm:$0xff]
    %v261 = vld [vmem:[#allocation8 + $0x44] sm:$0xf]
    %v262 = vld [vmem:[#allocation8 + $0x48] sm:$0xff]
    %v263 = vld [vmem:[#allocation8 + $0x50] sm:$0xf]
    %v264 = vld [vmem:[#allocation8 + $0x54] sm:$0xff]
    %v265 = vld [vmem:[#allocation8 + $0x5c] sm:$0xf]
    %v266 = vld [vmem:[#allocation8 + $0x60] sm:$0xff]
    %v267 = vld [vmem:[#allocation8 + $0x68] sm:$0xf]
    %v268 = vld [vmem:[#allocation8 + $0x6c] sm:$0xff]
    %v269 = vld [vmem:[#allocation8 + $0x74] sm:$0xf]
    %v270 = vld [vmem:[#allocation8 + $0x78] sm:$0xff]
    %v271 = vld [vmem:[#allocation8 + $0x80] sm:$0xf]
    %v272 = vld [vmem:[#allocation8 + $0x84] sm:$0xff]
    %v273 = vld [vmem:[#allocation8 + $0x8c] sm:$0xf]
    %v274 = vld [vmem:[#allocation8 + $0x90] sm:$0xff]
    %v275 = vld [vmem:[#allocation8 + $0x98] sm:$0xf]
    %v276 = vld [vmem:[#allocation8 + $0x9c] sm:$0xff]
    %v277 = vld [vmem:[#allocation8 + $0xa4] sm:$0xf]
    %v278 = vld [vmem:[#allocation8 + $0xa8] sm:$0xff]
    %v279 = vld [vmem:[#allocation8 + $0xb0] sm:$0xf]
    %v280 = vld [vmem:[#allocation8 + $0xb4] sm:$0xff]
    %v281 = vld [vmem:[#allocation8 + $0xbc] sm:$0xf]
    %v314 = vunpack.c.l.b16 %v250
    %v315 = vunpack.c.h.b16 %v250
    %v316 = vunpack.c.l.b16 %v251
    %v317 = vunpack.c.l.b16 %v252
    %v318 = vunpack.c.h.b16 %v252
    %v319 = vunpack.c.l.b16 %v253
    %v320 = vunpack.c.l.b16 %v254
    %v321 = vunpack.c.h.b16 %v254
    %v322 = vunpack.c.l.b16 %v255
    %v323 = vunpack.c.l.b16 %v256
    %v324 = vunpack.c.h.b16 %v256
    %v325 = vunpack.c.l.b16 %v257
    %v326 = vunpack.c.l.b16 %v258
    %v327 = vunpack.c.h.b16 %v258
    %v328 = vunpack.c.l.b16 %v259
    %v329 = vunpack.c.l.b16 %v260
    %v330 = vunpack.c.h.b16 %v260
    %v331 = vunpack.c.l.b16 %v261
    %v332 = vunpack.c.l.b16 %v262
    %v333 = vunpack.c.h.b16 %v262
    %v334 = vunpack.c.l.b16 %v263
    %v335 = vunpack.c.l.b16 %v264
    %v336 = vunpack.c.h.b16 %v264
    %v337 = vunpack.c.l.b16 %v265
    %v338 = vunpack.c.l.b16 %v266
    %v339 = vunpack.c.h.b16 %v266
    %v340 = vunpack.c.l.b16 %v267
    %v341 = vunpack.c.l.b16 %v268
    %v342 = vunpack.c.h.b16 %v268
    %v343 = vunpack.c.l.b16 %v269
    %v344 = vunpack.c.l.b16 %v270
    %v345 = vunpack.c.h.b16 %v270
    %v346 = vunpack.c.l.b16 %v271
    %v347 = vunpack.c.l.b16 %v272
    %v348 = vunpack.c.h.b16 %v272
    %v349 = vunpack.c.l.b16 %v273
    %v350 = vunpack.c.l.b16 %v274
    %v351 = vunpack.c.h.b16 %v274
    %v352 = vunpack.c.l.b16 %v275
    %v353 = vunpack.c.l.b16 %v276
    %v354 = vunpack.c.h.b16 %v276
    %v355 = vunpack.c.l.b16 %v277
    %v356 = vunpack.c.l.b16 %v278
    %v357 = vunpack.c.h.b16 %v278
    %v358 = vunpack.c.l.b16 %v279
    %v359 = vunpack.c.l.b16 %v280
    %v360 = vunpack.c.h.b16 %v280
    %v361 = vunpack.c.l.b16 %v281
    %v362 = vpack.c.b16 %v317, %v314
    %v363 = vpack.c.b16 %v318, %v315
    %v364 = vpack.c.b16 %v319, %v316
    %v365 = vpack.c.b16 %v323, %v320
    %v366 = vpack.c.b16 %v324, %v321
    %v367 = vpack.c.b16 %v325, %v322
    %v368 = vpack.c.b16 %v329, %v326
    %v369 = vpack.c.b16 %v330, %v327
    %v370 = vpack.c.b16 %v331, %v328
    %v371 = vpack.c.b16 %v335, %v332
    %v372 = vpack.c.b16 %v336, %v333
    %v373 = vpack.c.b16 %v337, %v334
    %v374 = vpack.c.b16 %v341, %v338
    %v375 = vpack.c.b16 %v342, %v339
    %v376 = vpack.c.b16 %v343, %v340
    %v377 = vpack.c.b16 %v347, %v344
    %v378 = vpack.c.b16 %v348, %v345
    %v379 = vpack.c.b16 %v349, %v346
    %v380 = vpack.c.b16 %v353, %v350
    %v381 = vpack.c.b16 %v354, %v351
    %v382 = vpack.c.b16 %v355, %v352
    %v383 = vpack.c.b16 %v359, %v356
    %v384 = vpack.c.b16 %v360, %v357
    %v385 = vpack.c.b16 %v361, %v358
    %410 = vmatprep.subr.bf16.mxu0 %v384
    %411 = vmatpush1.bf16.msra.mxu0 %v383
    %412 = vmatprep.subr.bf16.mxu0 %v381
    %413 = vmatpush1.bf16.msra.mxu0 %v380
    %414 = vmatprep.subr.bf16.mxu0 %v378
    %415 = vmatpush1.bf16.msra.mxu0 %v377
    %416 = vmatprep.subr.bf16.mxu0 %v375
    %417 = vmatpush1.bf16.msra.mxu0 %v374
    %418 = vmatprep.subr.bf16.mxu0 %v372
    %419 = vmatpush1.bf16.msra.mxu0 %v371
    %420 = vmatprep.subr.bf16.mxu0 %v369
    %421 = vmatpush1.bf16.msra.mxu0 %v368
    %422 = vmatprep.subr.bf16.mxu0 %v366
    %423 = vmatpush1.bf16.msra.mxu0 %v365
    %424 = vmatprep.subr.bf16.mxu0 %v363
    %425 = vmatpush1.bf16.msra.mxu0 %v362
    %426 = vmatprep.subr.bf16.mxu0 0
    %427 = vmatpush2.bf16.msra.mxu0 0
    %428 = vmatprep.subr.bf16.mxu0 0
    %429 = vmatpush2.bf16.msra.mxu0 0
    %430 = vmatprep.subr.bf16.mxu0 0
    %431 = vmatpush2.bf16.msra.mxu0 0
    %432 = vmatprep.subr.bf16.mxu0 0
    %433 = vmatpush2.bf16.msra.mxu0 0
    %434 = vmatprep.subr.bf16.mxu0 0
    %435 = vmatpush2.bf16.msra.mxu0 0
    %436 = vmatprep.subr.bf16.mxu0 0
    %437 = vmatpush2.bf16.msra.mxu0 0
    %438 = vmatprep.subr.bf16.mxu0 0
    %439 = vmatpush2.bf16.msra.mxu0 0
    %440 = vmatprep.subr.bf16.mxu0 0
    %441 = vmatpush2.bf16.msra.mxu0 0
    %442 = vmatprep.mubr.bf16.mxu0 0
    %443 = vmatmul.mubr.bf16.gmra.mxu0 %v249
    %v444 = vpop.f32.mrf.mxu0
    %v445 = vadd.f32 0.0, %v444
    %v446 = vpop.f32.mrf.mxu0
    %v447 = vadd.f32 0.0, %v446
    %v448 = vpop.f32.mrf.mxu0
    %v449 = vpop.f32.mrf.mxu0
    %450 = vdwg.mxu0
    %451 = vmatprep.subr.bf16.mxu0 0
    %452 = vmatpush1.bf16.msra.mxu0 %v385
    %453 = vmatprep.subr.bf16.mxu0 0
    %454 = vmatpush1.bf16.msra.mxu0 %v382
    %455 = vmatprep.subr.bf16.mxu0 0
    %456 = vmatpush1.bf16.msra.mxu0 %v379
    %457 = vmatprep.subr.bf16.mxu0 0
    %458 = vmatpush1.bf16.msra.mxu0 %v376
    %459 = vmatprep.subr.bf16.mxu0 0
    %460 = vmatpush1.bf16.msra.mxu0 %v373
    %461 = vmatprep.subr.bf16.mxu0 0
    %462 = vmatpush1.bf16.msra.mxu0 %v370
    %463 = vmatprep.subr.bf16.mxu0 0
    %464 = vmatpush1.bf16.msra.mxu0 %v367
    %465 = vmatprep.subr.bf16.mxu0 0
    %466 = vmatpush1.bf16.msra.mxu0 %v364
    %467 = vmatprep.subr.bf16.mxu0 0
    %468 = vmatpush2.bf16.msra.mxu0 0
    %469 = vmatprep.subr.bf16.mxu0 0
    %470 = vmatpush2.bf16.msra.mxu0 0
    %471 = vmatprep.subr.bf16.mxu0 0
    %472 = vmatpush2.bf16.msra.mxu0 0
    %473 = vmatprep.subr.bf16.mxu0 0
    %474 = vmatpush2.bf16.msra.mxu0 0
    %475 = vmatprep.subr.bf16.mxu0 0
    %476 = vmatpush2.bf16.msra.mxu0 0
    %477 = vmatprep.subr.bf16.mxu0 0
    %478 = vmatpush2.bf16.msra.mxu0 0
    %479 = vmatprep.subr.bf16.mxu0 0
    %480 = vmatpush2.bf16.msra.mxu0 0
    %481 = vmatprep.subr.bf16.mxu0 0
    %482 = vmatpush2.bf16.msra.mxu0 0
    %483 = vmatprep.mubr.bf16.mxu0 0
    %484 = vmatmul.mubr.bf16.gmra.mxu0 %v249
    %v485 = vpop.f32.mrf.mxu0
    %v486 = vadd.f32 0.0, %v485
    %v487 = vpop.f32.mrf.mxu0
    %v488 = vpop.f32.mrf.mxu0
    %v489 = vpop.f32.mrf.mxu0
    %490 = vdwg.mxu0
    %v491 = vadd.f32 %v203, %v445
    %v492 = vxor.u32 %v491, 2147483648
    %v493 = vmul.f32 %v492, 1.442695
    %v494 = vpow.pop %v493
    %v495 = vadd.f32 %v494, 1.0
    %v496 = vrcp.pop %v495
    %v497 = vmul.f32 1.0, %v496
    %v498 = vadd.f32 %v205, %v447
    %v499 = vxor.u32 %v498, 2147483648
    %v500 = vmul.f32 %v499, 1.442695
    %v501 = vpow.pop %v500
    %v502 = vadd.f32 %v501, 1.0
    %v503 = vrcp.pop %v502
    %v504 = vmul.f32 1.0, %v503
    %v505 = vld [vmem:[%s5] sm:$0x1]
    %v507 = vlaneseq
    %v508 = vshrl.u32 %v507, 7
    %v509 = vsub.s32 0, %v508
    %v510 = vrot.slane %v505, %v509
    %v512 = vadd.f32 %v486, %v510
    %v513 = vmul.f32 %v497, %v512
    %v514 = vadd.f32 %v244, %v513
    %v515 = vtanh.pop %v514
    %v516 = vsub.f32 1.0, %v504
    %v517 = vmul.f32 %v516, %v515
    %v518 = vmul.f32 %v504, %v104
    %v519 = vadd.f32 %v517, %v518
    %520 = vst [vmem:[#allocation12] sm:$0xff] %v519
    %v521 = vpack.c.bf16 %v519, %v519
    %v522 = vld [vmem:[#allocation10] sm:$0xf]
    %v523 = vld [vmem:[#allocation10 + $0x4] sm:$0xf]
    %v524 = vld [vmem:[#allocation10 + $0x8] sm:$0xf]
    %v525 = vld [vmem:[#allocation10 + $0xc] sm:$0xf]
    %v526 = vld [vmem:[#allocation10 + $0x10] sm:$0xf]
    %v527 = vld [vmem:[#allocation10 + $0x14] sm:$0xf]
    %v528 = vld [vmem:[#allocation10 + $0x18] sm:$0xf]
    %v529 = vld [vmem:[#allocation10 + $0x1c] sm:$0xf]
    %v530 = vld [vmem:[#allocation10 + $0x20] sm:$0xf]
    %v531 = vld [vmem:[#allocation10 + $0x24] sm:$0xf]
    %v532 = vld [vmem:[#allocation10 + $0x28] sm:$0xf]
    %v533 = vld [vmem:[#allocation10 + $0x2c] sm:$0xf]
    %v534 = vld [vmem:[#allocation10 + $0x30] sm:$0xf]
    %v535 = vld [vmem:[#allocation10 + $0x34] sm:$0xf]
    %v536 = vld [vmem:[#allocation10 + $0x38] sm:$0xf]
    %v537 = vld [vmem:[#allocation10 + $0x3c] sm:$0xf]
    %v538 = vld [vmem:[%s7] sm:$0x1]
    %v540 = vlaneseq
    %v541 = vshrl.u32 %v540, 7
    %v542 = vsub.s32 0, %v541
    %v543 = vrot.slane %v538, %v542
    %v561 = vunpack.c.l.b16 %v522
    %v562 = vunpack.c.l.b16 %v523
    %v563 = vunpack.c.l.b16 %v524
    %v564 = vunpack.c.l.b16 %v525
    %v565 = vunpack.c.l.b16 %v526
    %v566 = vunpack.c.l.b16 %v527
    %v567 = vunpack.c.l.b16 %v528
    %v568 = vunpack.c.l.b16 %v529
    %v569 = vunpack.c.l.b16 %v530
    %v570 = vunpack.c.l.b16 %v531
    %v571 = vunpack.c.l.b16 %v532
    %v572 = vunpack.c.l.b16 %v533
    %v573 = vunpack.c.l.b16 %v534
    %v574 = vunpack.c.l.b16 %v535
    %v575 = vunpack.c.l.b16 %v536
    %v576 = vunpack.c.l.b16 %v537
    %v577 = vpack.c.b16 %v562, %v561
    %v578 = vpack.c.b16 %v564, %v563
    %v579 = vpack.c.b16 %v566, %v565
    %v580 = vpack.c.b16 %v568, %v567
    %v581 = vpack.c.b16 %v570, %v569
    %v582 = vpack.c.b16 %v572, %v571
    %v583 = vpack.c.b16 %v574, %v573
    %v584 = vpack.c.b16 %v576, %v575
    %593 = vmatprep.subr.bf16.mxu0 0
    %594 = vmatpush1.bf16.msra.mxu0 %v584
    %595 = vmatprep.subr.bf16.mxu0 0
    %596 = vmatpush1.bf16.msra.mxu0 %v583
    %597 = vmatprep.subr.bf16.mxu0 0
    %598 = vmatpush1.bf16.msra.mxu0 %v582
    %599 = vmatprep.subr.bf16.mxu0 0
    %600 = vmatpush1.bf16.msra.mxu0 %v581
    %601 = vmatprep.subr.bf16.mxu0 0
    %602 = vmatpush1.bf16.msra.mxu0 %v580
    %603 = vmatprep.subr.bf16.mxu0 0
    %604 = vmatpush1.bf16.msra.mxu0 %v579
    %605 = vmatprep.subr.bf16.mxu0 0
    %606 = vmatpush1.bf16.msra.mxu0 %v578
    %607 = vmatprep.subr.bf16.mxu0 0
    %608 = vmatpush1.bf16.msra.mxu0 %v577
    %609 = vmatprep.subr.bf16.mxu0 0
    %610 = vmatpush2.bf16.msra.mxu0 0
    %611 = vmatprep.subr.bf16.mxu0 0
    %612 = vmatpush2.bf16.msra.mxu0 0
    %613 = vmatprep.subr.bf16.mxu0 0
    %614 = vmatpush2.bf16.msra.mxu0 0
    %615 = vmatprep.subr.bf16.mxu0 0
    %616 = vmatpush2.bf16.msra.mxu0 0
    %617 = vmatprep.subr.bf16.mxu0 0
    %618 = vmatpush2.bf16.msra.mxu0 0
    %619 = vmatprep.subr.bf16.mxu0 0
    %620 = vmatpush2.bf16.msra.mxu0 0
    %621 = vmatprep.subr.bf16.mxu0 0
    %622 = vmatpush2.bf16.msra.mxu0 0
    %623 = vmatprep.subr.bf16.mxu0 0
    %624 = vmatpush2.bf16.msra.mxu0 0
    %625 = vmatprep.mubr.bf16.mxu0 0
    %626 = vmatmul.mubr.bf16.gmra.mxu0 %v521
    %v627 = vpop.f32.mrf.mxu0
    %v628 = vadd.f32 %v543, %v627
    %v629 = vpop.f32.mrf.mxu0
    %v630 = vpop.f32.mrf.mxu0
    %v631 = vpop.f32.mrf.mxu0
    %632 = vdwg.mxu0
    %633 = vmax.xlane.f32.xlu0 %v628
    %v634 = vpop.xlane.xlu0 %633
    %v635 = vsub.f32 %v628, %v634
    %v636 = vmul.f32 %v635, 1.442695
    %v637 = vpow.pop %v636
    %638 = vadd.xlane.f32.xlu0 %v637
    %v639 = vpop.xlane.xlu0 %638
    %v640 = vlog2.pop %v639
    %v641 = vmul.f32 %v640, 0.6931472
    %v642 = vadd.f32 %v641, %v634
    %v643 = vsub.f32 %v628, %v642
    %644 = vst [vmem:[#allocation11] sm:$0xff] %v643
    // Predicated region
    $region58: #{tpu_custom_call.1} parent=1 // pred_check
      _
    $region59: #{tpu_custom_call.1} parent=1 // pred_check_branch
      %646 = sbr.rel (0) target = $region61
    $region60: #{tpu_custom_call.1} parent=1 // pred_region
      %s648 = ssub.s32 128, 128
      %649 = vsyncadd [#allocation4], %s648
      %s651 = sshll.u32 [#allocation11], 4
      %s652 = int_to_ptr.vmem [resolvable:$true] %s651
      %654 = dma.vmem_to_hbm [thread:$0]  %s652, 128, %s8, [#allocation4]
    $region61: #{tpu_custom_call.1} parent=1 // pred_fallthru
      _
    // Predicated region
    $region62: #{tpu_custom_call.1} parent=1 // pred_check
      _
    $region63: #{tpu_custom_call.1} parent=1 // pred_check_branch
      %656 = sbr.rel (0) target = $region65
    $region64: #{tpu_custom_call.1} parent=1 // pred_region
      %s658 = ssub.s32 128, 128
      %659 = vsyncadd [#allocation13], %s658
      %s661 = sshll.u32 [#allocation12], 4
      %s662 = int_to_ptr.vmem [resolvable:$true] %s661
      %664 = dma.vmem_to_hbm [thread:$0]  %s662, 128, %s9, [#allocation13]
    $region65: #{tpu_custom_call.1} parent=1 // pred_fallthru
      _
    // Predicated region
    $region66: #{tpu_custom_call.1} parent=1 // pred_check
      _
    $region67: #{tpu_custom_call.1} parent=1 // pred_check_branch
      %666 = sbr.rel (0) target = $region69
    $region68: #{tpu_custom_call.1} parent=1 // pred_region
      %667 = dma.done [#allocation4], 128
    $region69: #{tpu_custom_call.1} parent=1 // pred_fallthru
      _
    // Predicated region
    $region70: #{tpu_custom_call.1} parent=1 // pred_check
      _
    $region71: #{tpu_custom_call.1} parent=1 // pred_check_branch
      %669 = sbr.rel (0) target = $region73
    $region72: #{tpu_custom_call.1} parent=1 // pred_region
      %670 = dma.done [#allocation13], 128
    $region73: #{tpu_custom_call.1} parent=1 // pred_fallthru
      _
    %671 = vsyncpa [#allocation3], 1
    %672 = vsyncpa [#allocation6], 1
    %673 = vsyncpa [#allocation9], 1
    %674 = vsyncpa [#allocation4], 1
    %675 = vsyncpa [#allocation13], 1

</llo_original>
